<compile_context>
chip_gen: v7x
topology: tpu7x:2x2x1
jax: 0.10.0
libtpu: 0.0.40
codegen_flags: <defaults>
</compile_context>

<pallas_src>
import functools

import numpy as np
import jax
import jax.numpy as jnp
from jax.experimental import pallas as pl
from jax.experimental.pallas import tpu as pltpu


_LANE_GRAN = 512  # in-kernel sub-block width (lanes); (64, 512) f32 = 32 vregs


def _rbf_kernel(d_ref, c_ref, *rest, high_cutoff, alpha, beta, tolerance,
                normalize_output, has_mask, sub):
    """Transposed PhysNet RBF expansion.

    d_ref : (1, tn)    distances, lane-dense
    c_ref : (ngp, 1)   gaussian centers on the sublane axis (padded rows carry a
                       huge sentinel so their gaussians underflow to exactly 0)
    mask  : (1, tn)    optional {0,1} bead-validity mask (only if has_mask)
    o_ref : (ngp, tn)  expansions, lane-dense (full-width unmasked stores)

    The tile is walked in lane sub-blocks of `sub` columns inside a fori_loop so
    every (ngp, sub) intermediate stays small (no whole-tile VMEM round trip
    before the normalization scale).
    """
    if has_mask:
        mask_ref, o_ref = rest
    else:
        (o_ref,) = rest

    mu = c_ref[...]                                   # (ngp, 1), tile-resident
    n_sub = d_ref.shape[1] // sub

    def body(s, carry):
        start = pl.multiple_of(s * sub, sub)          # 512-aligned lane offset
        d = d_ref[:, pl.ds(start, sub)]               # (1, sub) f32

        # PhysNet polynomial cutoff envelope, Horner form:
        #   1 - 6 r^5 + 15 r^4 - 10 r^3  =  1 + r^3 * (-10 + r * (15 - 6 r))
        r = d * (1.0 / high_cutoff)
        r3 = r * r * r
        poly = 1.0 + r3 * (-10.0 + r * (15.0 - 6.0 * r))
        mod = jnp.where(d < high_cutoff, poly, 0.0)   # (1, sub)

        if has_mask:
            # Fold the {0,1} mask into the per-distance envelope: one VALU op on
            # the (1, sub) row instead of ngp ops on the broadcast array. Exact
            # for a 0/1 mask, also under normalization (guarded reciprocal).
            mod = mod * mask_ref[:, pl.ds(start, sub)]

        # Gaussian expansion in exp(-alpha*r) space: exp(-alpha*d) is computed
        # once per distance and broadcast across sublanes; centers broadcast
        # across lanes.
        ed = jnp.exp(-alpha * d)                      # (1, sub)   EUP
        diff = ed - mu                                # (ngp, sub)
        e = mod * jnp.exp(-beta * (diff * diff))      # (ngp, sub) EUP
        # TODO(synk): on v6e/v7x this exp could run in bf16 (~2x EUP throughput)
        # at ~1e-3 relative error; kept f32 for close module parity.

        # e >= 0 by construction (mod in [0,1], gaussian > 0): no abs() needed.
        e = jnp.where(e > tolerance, e, 0.0)

        if normalize_output:
            ssum = jnp.sum(e, axis=0, keepdims=True)  # (1, sub)
            # EUP reciprocal (separate issue slot -> ~free); guard all-zero
            # columns so padded/masked columns yield 0 instead of NaN.
            inv = pl.reciprocal(jnp.maximum(ssum, 1e-30), approx=True)
            e = e * inv

        o_ref[:, pl.ds(start, sub)] = e.astype(o_ref.dtype)
        return carry

    jax.lax.fori_loop(0, n_sub, body, 0)


def _round_up(x, m):
    return ((x + m - 1) // m) * m


@functools.partial(
    jax.jit,
    static_argnames=("low_cutoff", "high_cutoff", "alpha", "n_gaussians",
                     "normalize_output", "tolerance", "tile_lanes",
                     "out_dtype", "transposed_output"))
def polynomial_cutoff_rbf(distances, distance_mask=None, *,
                          low_cutoff=0.0, high_cutoff=10.0, alpha=1.0,
                          n_gaussians=64, normalize_output=False,
                          tolerance=1e-10, tile_lanes=16384,
                          out_dtype=jnp.float32, transposed_output=False):
    """distances: [n_examples, n_beads, n_neighbors] float.

    Returns [n_examples, n_beads, n_neighbors, n_gaussians] (module layout), or
    with transposed_output=True the raw (n_gaussians, n_distances) slab from the
    kernel (skips the final layout-change copy for fused consumers)."""
    E, B, N = distances.shape
    M = E * B * N
    ng = n_gaussians
    ngp = _round_up(ng, 8)                       # sublane padding of basis axis

    # Lane tiling: tn is a multiple of the in-kernel sub-block so the fori_loop
    # divides evenly; floor the tile count at 2 (and keep it even) when there is
    # enough work so both v7x TensorCores receive grid steps.
    mg = _round_up(M, _LANE_GRAN)
    n_tiles = max(1, -(-mg // tile_lanes))
    if mg >= 2 * _LANE_GRAN:
        n_tiles = max(n_tiles, 2)
        n_tiles += n_tiles % 2
    tn = _round_up(-(-mg // n_tiles), _LANE_GRAN)
    Mp = n_tiles * tn

    # Centers column (ngp, 1). Padded rows get a huge sentinel center so their
    # gaussian underflows to exactly 0 (keeps the normalization sum correct).
    centers = jnp.linspace(np.exp(-high_cutoff), np.exp(-low_cutoff),
                           ng, dtype=jnp.float32)
    if ngp != ng:
        centers = jnp.concatenate(
            [centers, jnp.full((ngp - ng,), 1e6, dtype=jnp.float32)])
    centers_col = centers.reshape(ngp, 1)
    beta = float(np.power(2.0 / ng * (1.0 - np.exp(-high_cutoff)), -2))

    # Lane-dense distance row (1, Mp); pad columns with a value past the cutoff
    # so padded outputs are exactly zero (they are sliced off anyway).
    d_row = distances.reshape(1, M).astype(jnp.float32)
    if Mp != M:
        d_row = jnp.pad(d_row, ((0, 0), (0, Mp - M)),
                        constant_values=2.0 * high_cutoff)

    has_mask = distance_mask is not None
    operands = [d_row, centers_col]
    in_specs = [
        pl.BlockSpec((1, tn), lambda i: (0, i)),       # distances (lane-dense)
        pl.BlockSpec((ngp, 1), lambda i: (0, 0)),      # centers (resident)
    ]
    if has_mask:
        m_row = distance_mask.reshape(1, M).astype(jnp.float32)
        if Mp != M:
            m_row = jnp.pad(m_row, ((0, 0), (0, Mp - M)))
        operands.append(m_row)
        in_specs.append(pl.BlockSpec((1, tn), lambda i: (0, i)))

    kernel = functools.partial(
        _rbf_kernel, high_cutoff=float(high_cutoff), alpha=float(alpha),
        beta=beta, tolerance=float(tolerance),
        normalize_output=normalize_output, has_mask=has_mask, sub=_LANE_GRAN)

    out_t = pl.pallas_call(
        kernel,
        out_shape=jax.ShapeDtypeStruct((ngp, Mp), out_dtype),
        grid=(n_tiles,),
        in_specs=in_specs,
        out_specs=pl.BlockSpec((ngp, tn), lambda i: (0, i)),
        compiler_params=pltpu.CompilerParams(
            dimension_semantics=("parallel",)),
    )(*operands)

    if transposed_output:
        # (ng, M) slab straight from the kernel — no layout-change copy.
        return out_t[:ng, :M]

    # (ng, M) -> [E, B, N, ng]: one XLA relayout to hand back the module layout.
    # TODO(synk): for large M prefer transposed_output=True + a fused consumer;
    # this copy re-touches the whole output in HBM.
    return out_t[:ng, :M].T.reshape(E, B, N, ng)


def _reference(distances, distance_mask=None, *, low_cutoff=0.0, high_cutoff=10.0,
               alpha=1.0, n_gaussians=64, normalize_output=False, tolerance=1e-10):
    """Pure-JAX transcription of the PyTorch forward."""
    centers = jnp.linspace(np.exp(-high_cutoff), np.exp(-low_cutoff),
                           n_gaussians, dtype=jnp.float32)
    beta = float(np.power(2.0 / n_gaussians * (1.0 - np.exp(-high_cutoff)), -2))
    d = distances[..., None]
    gauss = jnp.exp(-beta * (jnp.exp(-alpha * d) - centers) ** 2)
    r = distances / high_cutoff
    mod = jnp.where(distances < high_cutoff,
                    1 - 6 * r ** 5 + 15 * r ** 4 - 10 * r ** 3,
                    jnp.zeros_like(distances))[..., None]
    e = mod * gauss
    e = jnp.where(jnp.abs(e) > tolerance, e, jnp.zeros_like(e))
    if normalize_output:
        e = e / jnp.sum(e, axis=-1, keepdims=True)
    if distance_mask is not None:
        e = e * distance_mask[..., None].astype(e.dtype)
    return e


if __name__ == "__main__":
    key = jax.random.PRNGKey(0)
    k1, k2, k3 = jax.random.split(key, 3)
    E, B, N, ng = 2, 8, 8, 64

    # Test 1: default config; distances in [0, 12) so some exceed high_cutoff=10
    # (exercises the zeroed envelope branch).
    distances = jax.random.uniform(k1, (E, B, N), dtype=jnp.float32,
                                   minval=0.0, maxval=12.0)
    out = jax.block_until_ready(polynomial_cutoff_rbf(distances, n_gaussians=ng))
    ref = _reference(distances, n_gaussians=ng)
    assert out.shape == (E, B, N, ng)
    # atol absorbs the few-ulp cancellation of the quintic envelope near the
    # cutoff (values there are O(1e-5) with ~1e-6-scale rounding differences).
    np.testing.assert_allclose(np.asarray(out), np.asarray(ref),
                               rtol=2e-4, atol=1e-4)

    # Test 2: fused distance_mask (folded into the envelope) + normalized output.
    # Distances kept below the cutoff so the reference's un-guarded normalization
    # stays finite; looser tolerance covers the approx EUP reciprocal in-kernel.
    d2 = jax.random.uniform(k2, (E, B, N), dtype=jnp.float32,
                            minval=0.0, maxval=9.0)
    mask = (jax.random.uniform(k3, (E, B, N)) > 0.3).astype(jnp.float32)
    out2 = jax.block_until_ready(
        polynomial_cutoff_rbf(d2, mask, n_gaussians=ng, normalize_output=True))
    ref2 = _reference(d2, mask, n_gaussians=ng, normalize_output=True)
    np.testing.assert_allclose(np.asarray(out2), np.asarray(ref2),
                               rtol=1e-2, atol=1e-3)

    # Test 3: transposed_output escape hatch returns the same data, laid out
    # (ng, M), without the final relayout copy.
    out3 = jax.block_until_ready(
        polynomial_cutoff_rbf(distances, n_gaussians=ng, transposed_output=True))
    assert out3.shape == (ng, E * B * N)
    np.testing.assert_array_equal(
        np.asarray(out3).T.reshape(E, B, N, ng), np.asarray(out))

    print("KERNEL_OK")
</pallas_src>

<mosaic_0001>
module attributes {stable_mosaic.version = 11 : i64} {
  func.func @_rbf_kernel(%arg0: i32, %arg1: memref<1x512xf32, #tpu.memory_space<vmem>>, %arg2: memref<64x1xf32, #tpu.memory_space<vmem>>, %arg3: memref<64x512xf32, #tpu.memory_space<vmem>>) attributes {dimension_semantics = [#tpu.dimension_semantics<parallel>], iteration_bounds = array<i64: 1>, scalar_prefetch = 0 : i64, scratch_operands = 0 : i64, tpu.core_type = #tpu.core_type<tc>, window_params = [{transform_indices = @transform_0, window_bounds = array<i64: 1, 512>}, {pipeline_mode = #tpu.pipeline_mode<synchronous>, transform_indices = @transform_1, window_bounds = array<i64: 64, 1>}, {transform_indices = @transform_2, window_bounds = array<i64: 64, 512>}]} {
    %c0 = arith.constant 0 : index
    %c0_0 = arith.constant 0 : index
    %0 = vector.load %arg2[%c0, %c0_0] : memref<64x1xf32, #tpu.memory_space<vmem>>, vector<64x1xf32>
    %c0_i32 = arith.constant 0 : i32
    %c512_i32 = arith.constant 512 : i32
    %1 = arith.muli %c0_i32, %c512_i32 : i32
    %2 = tpu.assume_multiple %1, 512 : i32
    %c0_1 = arith.constant 0 : index
    %3 = arith.index_cast %2 : i32 to index
    %4 = vector.load %arg1[%c0_1, %3] : memref<1x512xf32, #tpu.memory_space<vmem>>, vector<1x512xf32>
    %cst = arith.constant 1.000000e-01 : f32
    %5 = vector.broadcast %cst : f32 to vector<1x512xf32>
    %6 = arith.mulf %4, %5 : vector<1x512xf32>
    %7 = arith.mulf %6, %6 : vector<1x512xf32>
    %8 = arith.mulf %7, %6 : vector<1x512xf32>
    %cst_2 = arith.constant 6.000000e+00 : f32
    %9 = vector.broadcast %cst_2 : f32 to vector<1x512xf32>
    %10 = arith.mulf %9, %6 : vector<1x512xf32>
    %cst_3 = arith.constant 1.500000e+01 : f32
    %11 = vector.broadcast %cst_3 : f32 to vector<1x512xf32>
    %12 = arith.subf %11, %10 : vector<1x512xf32>
    %13 = arith.mulf %6, %12 : vector<1x512xf32>
    %cst_4 = arith.constant -1.000000e+01 : f32
    %14 = vector.broadcast %cst_4 : f32 to vector<1x512xf32>
    %15 = arith.addf %14, %13 : vector<1x512xf32>
    %16 = arith.mulf %8, %15 : vector<1x512xf32>
    %cst_5 = arith.constant 1.000000e+00 : f32
    %17 = vector.broadcast %cst_5 : f32 to vector<1x512xf32>
    %18 = arith.addf %17, %16 : vector<1x512xf32>
    %cst_6 = arith.constant 1.000000e+01 : f32
    %19 = vector.broadcast %cst_6 : f32 to vector<1x512xf32>
    %20 = arith.cmpf olt, %4, %19 : vector<1x512xf32>
    %cst_7 = arith.constant 0.000000e+00 : f32
    %21 = vector.broadcast %cst_7 : f32 to vector<1x512xf32>
    %22 = arith.select %20, %18, %21 : vector<1x512xi1>, vector<1x512xf32>
    %cst_8 = arith.constant -1.000000e+00 : f32
    %23 = vector.broadcast %cst_8 : f32 to vector<1x512xf32>
    %24 = arith.mulf %23, %4 : vector<1x512xf32>
    %25 = math.exp %24 : vector<1x512xf32>
    %26 = vector.broadcast %25 : vector<1x512xf32> to vector<64x512xf32>
    %27 = vector.broadcast %0 : vector<64x1xf32> to vector<64x512xf32>
    %28 = arith.subf %26, %27 : vector<64x512xf32>
    %29 = arith.mulf %28, %28 : vector<64x512xf32>
    %cst_9 = arith.constant -1024.09302 : f32
    %30 = vector.broadcast %cst_9 : f32 to vector<64x512xf32>
    %31 = arith.mulf %30, %29 : vector<64x512xf32>
    %32 = math.exp %31 : vector<64x512xf32>
    %33 = vector.broadcast %22 : vector<1x512xf32> to vector<64x512xf32>
    %34 = arith.mulf %33, %32 : vector<64x512xf32>
    %cst_10 = arith.constant 1.000000e-10 : f32
    %35 = vector.broadcast %cst_10 : f32 to vector<64x512xf32>
    %36 = arith.cmpf ogt, %34, %35 : vector<64x512xf32>
    %cst_11 = arith.constant 0.000000e+00 : f32
    %37 = vector.broadcast %cst_11 : f32 to vector<64x512xf32>
    %38 = arith.select %36, %34, %37 : vector<64x512xi1>, vector<64x512xf32>
    %c0_12 = arith.constant 0 : index
    %39 = arith.index_cast %2 : i32 to index
    %40 = vector.load %arg3[%c0_12, %39] : memref<64x512xf32, #tpu.memory_space<vmem>>, vector<64x512xf32>
    tpu.vector_store %arg3[%c0_12, %39], %38 {strides = array<i32>} : memref<64x512xf32, #tpu.memory_space<vmem>>, vector<64x512xf32>,
    %c1_i32 = arith.constant 1 : i32
    return
  }
  func.func @transform_0(%arg0: i32) -> (i32, i32) {
    %c0_i32 = arith.constant 0 : i32
    %c0_i32_0 = arith.constant 0 : i32
    return %c0_i32, %arg0 : i32, i32
  }
  func.func @transform_1(%arg0: i32) -> (i32, i32) {
    %c0_i32 = arith.constant 0 : i32
    %c0_i32_0 = arith.constant 0 : i32
    %c0_i32_1 = arith.constant 0 : i32
    return %c0_i32, %c0_i32_0 : i32, i32
  }
  func.func @transform_2(%arg0: i32) -> (i32, i32) {
    %c0_i32 = arith.constant 0 : i32
    %c0_i32_0 = arith.constant 0 : i32
    return %c0_i32, %arg0 : i32, i32
  }
}

</mosaic_0001>

<llo_original>
// kernel: polynomial_cutoff_rbf.1
$region0: #{polynomial_cutoff_rbf.1}
  #allocation0 [shape = 'u32[]', space=smem, size = 0x4, offset = 0x4, fixed_abs, tag = 'smem constant byte address 0x4 - core index']
  #allocation1 [shape = 'u32[144,128]{1,0:T(1,128)}', space=vmem, size = 0x12000, scoped, tag = 'internal scratch']
  %s0 = inlined_call_operand.vmem [shape: f32[1,512], index: 0, kind: input, shape index: {}]
  %s1 = inlined_call_operand.vmem [shape: f32[64,1], index: 1, kind: input, shape index: {}]
  %s2 = inlined_call_operand.vmem [shape: f32[64,512], index: 2, kind: output, shape index: {}]
  %s3 = sld [smem:[#allocation0]]
  $region18: #{polynomial_cutoff_rbf.1} parent=0
    _
  %s5 = ssub.s32 1, %s3
  %s6 = scalar_select 0, %s5, %s3
  // Predicated region
  $region2: #{polynomial_cutoff_rbf.1} parent=0 // pred_check
    _
  $region3: #{polynomial_cutoff_rbf.1} parent=0 // pred_check_branch
    %8 = sbr.rel (0) target = $region5
  $region4: #{polynomial_cutoff_rbf.1} parent=0 // pred_region
    _
  $region5: #{polynomial_cutoff_rbf.1} parent=0 // pred_fallthru
    _
  // Predicated region
  $region6: #{polynomial_cutoff_rbf.1} parent=0 // pred_check
    _
  $region7: #{polynomial_cutoff_rbf.1} parent=0 // pred_check_branch
    %10 = sbr.rel (0) target = $region9
  $region8: #{polynomial_cutoff_rbf.1} parent=0 // pred_region
    _
  $region9: #{polynomial_cutoff_rbf.1} parent=0 // pred_fallthru
    _
  %v11 = vld [vmem:[%s1] sm:$0xff]
  %v12 = vld [vmem:[%s1 + $0x8] sm:$0xff]
  %v13 = vld [vmem:[%s1 + $0x10] sm:$0xff]
  %v14 = vld [vmem:[%s1 + $0x18] sm:$0xff]
  %v15 = vld [vmem:[%s1 + $0x20] sm:$0xff]
  %v16 = vld [vmem:[%s1 + $0x28] sm:$0xff]
  %v17 = vld [vmem:[%s1 + $0x30] sm:$0xff]
  %v18 = vld [vmem:[%s1 + $0x38] sm:$0xff]
  %v19 = vld [vmem:[%s0] sm:$0xf]
  %v20 = vmul.f32 %v19, 0.1
  %v21 = vmul.f32 %v20, %v20
  %v22 = vmul.f32 %v21, %v20
  %v23 = vmul.f32 %v20, 6.0
  %v24 = vsub.f32 15.0, %v23
  %v25 = vmul.f32 %v20, %v24
  %v26 = vadd.f32 %v25, -10.0
  %v27 = vmul.f32 %v22, %v26
  %v28 = vadd.f32 %v27, 1.0
  %vm29 = vcmp.lt.f32.partialorder %v19, 10.0
  %v30 = vsel %vm29, %v28, 0.0
  %v31 = vmul.f32 %v19, -1.0
  %v32 = vmul.f32 %v31, 1.442695
  %v33 = vpow.pop %v32
  %v35 = vlaneseq
  %v36 = vshrl.u32 %v35, 7
  %v37 = vsub.s32 0, %v36
  %v38 = vrot.slane %v33, %v37
  %v39 = vlaneseq
  %v40 = vshrl.u32 %v39, 7
  %v41 = vsub.s32 1, %v40
  %v42 = vrot.slane %v33, %v41
  %v43 = vlaneseq
  %v44 = vshrl.u32 %v43, 7
  %v45 = vsub.s32 2, %v44
  %v46 = vrot.slane %v33, %v45
  %v47 = vlaneseq
  %v48 = vshrl.u32 %v47, 7
  %v49 = vsub.s32 3, %v48
  %v50 = vrot.slane %v33, %v49
  %56 = vset.pattern.permute.xlu0 0
  %57 = vperm.xlu0 %56, %v11
  %v58 = vpop.permute.xlu0 %57
  %61 = vset.pattern.permute.xlu0 0
  %62 = vperm.xlu0 %61, %v12
  %v63 = vpop.permute.xlu0 %62
  %66 = vset.pattern.permute.xlu0 0
  %67 = vperm.xlu0 %66, %v13
  %v68 = vpop.permute.xlu0 %67
  %71 = vset.pattern.permute.xlu0 0
  %72 = vperm.xlu0 %71, %v14
  %v73 = vpop.permute.xlu0 %72
  %76 = vset.pattern.permute.xlu0 0
  %77 = vperm.xlu0 %76, %v15
  %v78 = vpop.permute.xlu0 %77
  %81 = vset.pattern.permute.xlu0 0
  %82 = vperm.xlu0 %81, %v16
  %v83 = vpop.permute.xlu0 %82
  %86 = vset.pattern.permute.xlu0 0
  %87 = vperm.xlu0 %86, %v17
  %v88 = vpop.permute.xlu0 %87
  %91 = vset.pattern.permute.xlu0 0
  %92 = vperm.xlu0 %91, %v18
  %v93 = vpop.permute.xlu0 %92
  %v95 = vsub.f32 %v38, %v58
  %v96 = vsub.f32 %v42, %v58
  %v97 = vsub.f32 %v46, %v58
  %v98 = vsub.f32 %v50, %v58
  %v99 = vsub.f32 %v38, %v63
  %v100 = vsub.f32 %v42, %v63
  %v101 = vsub.f32 %v46, %v63
  %v102 = vsub.f32 %v50, %v63
  %v103 = vsub.f32 %v38, %v68
  %v104 = vsub.f32 %v42, %v68
  %v105 = vsub.f32 %v46, %v68
  %v106 = vsub.f32 %v50, %v68
  %v107 = vsub.f32 %v38, %v73
  %v108 = vsub.f32 %v42, %v73
  %v109 = vsub.f32 %v46, %v73
  %v110 = vsub.f32 %v50, %v73
  %v111 = vsub.f32 %v38, %v78
  %v112 = vsub.f32 %v42, %v78
  %v113 = vsub.f32 %v46, %v78
  %v114 = vsub.f32 %v50, %v78
  %v115 = vsub.f32 %v38, %v83
  %v116 = vsub.f32 %v42, %v83
  %v117 = vsub.f32 %v46, %v83
  %v118 = vsub.f32 %v50, %v83
  %v119 = vsub.f32 %v38, %v88
  %v120 = vsub.f32 %v42, %v88
  %v121 = vsub.f32 %v46, %v88
  %v122 = vsub.f32 %v50, %v88
  %v123 = vsub.f32 %v38, %v93
  %v124 = vsub.f32 %v42, %v93
  %v125 = vsub.f32 %v46, %v93
  %v126 = vsub.f32 %v50, %v93
  %v127 = vmul.f32 %v95, %v95
  %v128 = vmul.f32 %v96, %v96
  %v129 = vmul.f32 %v97, %v97
  %v130 = vmul.f32 %v98, %v98
  %v131 = vmul.f32 %v99, %v99
  %v132 = vmul.f32 %v100, %v100
  %v133 = vmul.f32 %v101, %v101
  %v134 = vmul.f32 %v102, %v102
  %v135 = vmul.f32 %v103, %v103
  %v136 = vmul.f32 %v104, %v104
  %v137 = vmul.f32 %v105, %v105
  %v138 = vmul.f32 %v106, %v106
  %v139 = vmul.f32 %v107, %v107
  %v140 = vmul.f32 %v108, %v108
  %v141 = vmul.f32 %v109, %v109
  %v142 = vmul.f32 %v110, %v110
  %v143 = vmul.f32 %v111, %v111
  %v144 = vmul.f32 %v112, %v112
  %v145 = vmul.f32 %v113, %v113
  %v146 = vmul.f32 %v114, %v114
  %v147 = vmul.f32 %v115, %v115
  %v148 = vmul.f32 %v116, %v116
  %v149 = vmul.f32 %v117, %v117
  %v150 = vmul.f32 %v118, %v118
  %v151 = vmul.f32 %v119, %v119
  %v152 = vmul.f32 %v120, %v120
  %v153 = vmul.f32 %v121, %v121
  %v154 = vmul.f32 %v122, %v122
  %v155 = vmul.f32 %v123, %v123
  %v156 = vmul.f32 %v124, %v124
  %v157 = vmul.f32 %v125, %v125
  %v158 = vmul.f32 %v126, %v126
  %v159 = vmul.f32 %v127, -1024.093
  %v160 = vmul.f32 %v128, -1024.093
  %v161 = vmul.f32 %v129, -1024.093
  %v162 = vmul.f32 %v130, -1024.093
  %v163 = vmul.f32 %v131, -1024.093
  %v164 = vmul.f32 %v132, -1024.093
  %v165 = vmul.f32 %v133, -1024.093
  %v166 = vmul.f32 %v134, -1024.093
  %v167 = vmul.f32 %v135, -1024.093
  %v168 = vmul.f32 %v136, -1024.093
  %v169 = vmul.f32 %v137, -1024.093
  %v170 = vmul.f32 %v138, -1024.093
  %v171 = vmul.f32 %v139, -1024.093
  %v172 = vmul.f32 %v140, -1024.093
  %v173 = vmul.f32 %v141, -1024.093
  %v174 = vmul.f32 %v142, -1024.093
  %v175 = vmul.f32 %v143, -1024.093
  %v176 = vmul.f32 %v144, -1024.093
  %v177 = vmul.f32 %v145, -1024.093
  %v178 = vmul.f32 %v146, -1024.093
  %v179 = vmul.f32 %v147, -1024.093
  %v180 = vmul.f32 %v148, -1024.093
  %v181 = vmul.f32 %v149, -1024.093
  %v182 = vmul.f32 %v150, -1024.093
  %v183 = vmul.f32 %v151, -1024.093
  %v184 = vmul.f32 %v152, -1024.093
  %v185 = vmul.f32 %v153, -1024.093
  %v186 = vmul.f32 %v154, -1024.093
  %v187 = vmul.f32 %v155, -1024.093
  %v188 = vmul.f32 %v156, -1024.093
  %v189 = vmul.f32 %v157, -1024.093
  %v190 = vmul.f32 %v158, -1024.093
  %v191 = vmul.f32 %v159, 1.442695
  %v192 = vpow.pop %v191
  %v193 = vmul.f32 %v160, 1.442695
  %v194 = vpow.pop %v193
  %v195 = vmul.f32 %v161, 1.442695
  %v196 = vpow.pop %v195
  %v197 = vmul.f32 %v162, 1.442695
  %v198 = vpow.pop %v197
  %v199 = vmul.f32 %v163, 1.442695
  %v200 = vpow.pop %v199
  %v201 = vmul.f32 %v164, 1.442695
  %v202 = vpow.pop %v201
  %v203 = vmul.f32 %v165, 1.442695
  %v204 = vpow.pop %v203
  %v205 = vmul.f32 %v166, 1.442695
  %v206 = vpow.pop %v205
  %v207 = vmul.f32 %v167, 1.442695
  %v208 = vpow.pop %v207
  %v209 = vmul.f32 %v168, 1.442695
  %v210 = vpow.pop %v209
  %v211 = vmul.f32 %v169, 1.442695
  %v212 = vpow.pop %v211
  %v213 = vmul.f32 %v170, 1.442695
  %v214 = vpow.pop %v213
  %v215 = vmul.f32 %v171, 1.442695
  %v216 = vpow.pop %v215
  %v217 = vmul.f32 %v172, 1.442695
  %v218 = vpow.pop %v217
  %v219 = vmul.f32 %v173, 1.442695
  %v220 = vpow.pop %v219
  %v221 = vmul.f32 %v174, 1.442695
  %v222 = vpow.pop %v221
  %v223 = vmul.f32 %v175, 1.442695
  %v224 = vpow.pop %v223
  %v225 = vmul.f32 %v176, 1.442695
  %v226 = vpow.pop %v225
  %v227 = vmul.f32 %v177, 1.442695
  %v228 = vpow.pop %v227
  %v229 = vmul.f32 %v178, 1.442695
  %v230 = vpow.pop %v229
  %v231 = vmul.f32 %v179, 1.442695
  %v232 = vpow.pop %v231
  %v233 = vmul.f32 %v180, 1.442695
  %v234 = vpow.pop %v233
  %v235 = vmul.f32 %v181, 1.442695
  %v236 = vpow.pop %v235
  %v237 = vmul.f32 %v182, 1.442695
  %v238 = vpow.pop %v237
  %v239 = vmul.f32 %v183, 1.442695
  %v240 = vpow.pop %v239
  %v241 = vmul.f32 %v184, 1.442695
  %v242 = vpow.pop %v241
  %v243 = vmul.f32 %v185, 1.442695
  %v244 = vpow.pop %v243
  %v245 = vmul.f32 %v186, 1.442695
  %v246 = vpow.pop %v245
  %v247 = vmul.f32 %v187, 1.442695
  %v248 = vpow.pop %v247
  %v249 = vmul.f32 %v188, 1.442695
  %v250 = vpow.pop %v249
  %v251 = vmul.f32 %v189, 1.442695
  %v252 = vpow.pop %v251
  %v253 = vmul.f32 %v190, 1.442695
  %v254 = vpow.pop %v253
  %v256 = vlaneseq
  %v257 = vshrl.u32 %v256, 7
  %v258 = vsub.s32 0, %v257
  %v259 = vrot.slane %v30, %v258
  %v260 = vlaneseq
  %v261 = vshrl.u32 %v260, 7
  %v262 = vsub.s32 1, %v261
  %v263 = vrot.slane %v30, %v262
  %v264 = vlaneseq
  %v265 = vshrl.u32 %v264, 7
  %v266 = vsub.s32 2, %v265
  %v267 = vrot.slane %v30, %v266
  %v268 = vlaneseq
  %v269 = vshrl.u32 %v268, 7
  %v270 = vsub.s32 3, %v269
  %v271 = vrot.slane %v30, %v270
  %v276 = vmul.f32 %v259, %v192
  %v277 = vmul.f32 %v263, %v194
  %v278 = vmul.f32 %v267, %v196
  %v279 = vmul.f32 %v271, %v198
  %v280 = vmul.f32 %v259, %v200
  %v281 = vmul.f32 %v263, %v202
  %v282 = vmul.f32 %v267, %v204
  %v283 = vmul.f32 %v271, %v206
  %v284 = vmul.f32 %v259, %v208
  %v285 = vmul.f32 %v263, %v210
  %v286 = vmul.f32 %v267, %v212
  %v287 = vmul.f32 %v271, %v214
  %v288 = vmul.f32 %v259, %v216
  %v289 = vmul.f32 %v263, %v218
  %v290 = vmul.f32 %v267, %v220
  %v291 = vmul.f32 %v271, %v222
  %v292 = vmul.f32 %v259, %v224
  %v293 = vmul.f32 %v263, %v226
  %v294 = vmul.f32 %v267, %v228
  %v295 = vmul.f32 %v271, %v230
  %v296 = vmul.f32 %v259, %v232
  %v297 = vmul.f32 %v263, %v234
  %v298 = vmul.f32 %v267, %v236
  %v299 = vmul.f32 %v271, %v238
  %v300 = vmul.f32 %v259, %v240
  %v301 = vmul.f32 %v263, %v242
  %v302 = vmul.f32 %v267, %v244
  %v303 = vmul.f32 %v271, %v246
  %v304 = vmul.f32 %v259, %v248
  %v305 = vmul.f32 %v263, %v250
  %v306 = vmul.f32 %v267, %v252
  %v307 = vmul.f32 %v271, %v254
  %vm308 = vcmp.gt.f32.partialorder %v276, 1e-10
  %vm309 = vcmp.gt.f32.partialorder %v277, 1e-10
  %vm310 = vcmp.gt.f32.partialorder %v278, 1e-10
  %vm311 = vcmp.gt.f32.partialorder %v279, 1e-10
  %vm312 = vcmp.gt.f32.partialorder %v280, 1e-10
  %vm313 = vcmp.gt.f32.partialorder %v281, 1e-10
  %vm314 = vcmp.gt.f32.partialorder %v282, 1e-10
  %vm315 = vcmp.gt.f32.partialorder %v283, 1e-10
  %vm316 = vcmp.gt.f32.partialorder %v284, 1e-10
  %vm317 = vcmp.gt.f32.partialorder %v285, 1e-10
  %vm318 = vcmp.gt.f32.partialorder %v286, 1e-10
  %vm319 = vcmp.gt.f32.partialorder %v287, 1e-10
  %vm320 = vcmp.gt.f32.partialorder %v288, 1e-10
  %vm321 = vcmp.gt.f32.partialorder %v289, 1e-10
  %vm322 = vcmp.gt.f32.partialorder %v290, 1e-10
  %vm323 = vcmp.gt.f32.partialorder %v291, 1e-10
  %vm324 = vcmp.gt.f32.partialorder %v292, 1e-10
  %vm325 = vcmp.gt.f32.partialorder %v293, 1e-10
  %vm326 = vcmp.gt.f32.partialorder %v294, 1e-10
  %vm327 = vcmp.gt.f32.partialorder %v295, 1e-10
  %vm328 = vcmp.gt.f32.partialorder %v296, 1e-10
  %vm329 = vcmp.gt.f32.partialorder %v297, 1e-10
  %vm330 = vcmp.gt.f32.partialorder %v298, 1e-10
  %vm331 = vcmp.gt.f32.partialorder %v299, 1e-10
  %vm332 = vcmp.gt.f32.partialorder %v300, 1e-10
  %vm333 = vcmp.gt.f32.partialorder %v301, 1e-10
  %vm334 = vcmp.gt.f32.partialorder %v302, 1e-10
  %vm335 = vcmp.gt.f32.partialorder %v303, 1e-10
  %vm336 = vcmp.gt.f32.partialorder %v304, 1e-10
  %vm337 = vcmp.gt.f32.partialorder %v305, 1e-10
  %vm338 = vcmp.gt.f32.partialorder %v306, 1e-10
  %vm339 = vcmp.gt.f32.partialorder %v307, 1e-10
  %v340 = vsel %vm308, %v276, 0.0
  %v341 = vsel %vm309, %v277, 0.0
  %v342 = vsel %vm310, %v278, 0.0
  %v343 = vsel %vm311, %v279, 0.0
  %v344 = vsel %vm312, %v280, 0.0
  %v345 = vsel %vm313, %v281, 0.0
  %v346 = vsel %vm314, %v282, 0.0
  %v347 = vsel %vm315, %v283, 0.0
  %v348 = vsel %vm316, %v284, 0.0
  %v349 = vsel %vm317, %v285, 0.0
  %v350 = vsel %vm318, %v286, 0.0
  %v351 = vsel %vm319, %v287, 0.0
  %v352 = vsel %vm320, %v288, 0.0
  %v353 = vsel %vm321, %v289, 0.0
  %v354 = vsel %vm322, %v290, 0.0
  %v355 = vsel %vm323, %v291, 0.0
  %v356 = vsel %vm324, %v292, 0.0
  %v357 = vsel %vm325, %v293, 0.0
  %v358 = vsel %vm326, %v294, 0.0
  %v359 = vsel %vm327, %v295, 0.0
  %v360 = vsel %vm328, %v296, 0.0
  %v361 = vsel %vm329, %v297, 0.0
  %v362 = vsel %vm330, %v298, 0.0
  %v363 = vsel %vm331, %v299, 0.0
  %v364 = vsel %vm332, %v300, 0.0
  %v365 = vsel %vm333, %v301, 0.0
  %v366 = vsel %vm334, %v302, 0.0
  %v367 = vsel %vm335, %v303, 0.0
  %v368 = vsel %vm336, %v304, 0.0
  %v369 = vsel %vm337, %v305, 0.0
  %v370 = vsel %vm338, %v306, 0.0
  %v371 = vsel %vm339, %v307, 0.0
  %372 = vst [vmem:[%s2] sm:$0xff] %v340
  %373 = vst [vmem:[%s2 + $0x8] sm:$0xff] %v341
  %374 = vst [vmem:[%s2 + $0x10] sm:$0xff] %v342
  %375 = vst [vmem:[%s2 + $0x18] sm:$0xff] %v343
  %376 = vst [vmem:[%s2 + $0x20] sm:$0xff] %v344
  %377 = vst [vmem:[%s2 + $0x28] sm:$0xff] %v345
  %378 = vst [vmem:[%s2 + $0x30] sm:$0xff] %v346
  %379 = vst [vmem:[%s2 + $0x38] sm:$0xff] %v347
  %380 = vst [vmem:[%s2 + $0x40] sm:$0xff] %v348
  %381 = vst [vmem:[%s2 + $0x48] sm:$0xff] %v349
  %382 = vst [vmem:[%s2 + $0x50] sm:$0xff] %v350
  %383 = vst [vmem:[%s2 + $0x58] sm:$0xff] %v351
  %384 = vst [vmem:[%s2 + $0x60] sm:$0xff] %v352
  %385 = vst [vmem:[%s2 + $0x68] sm:$0xff] %v353
  %386 = vst [vmem:[%s2 + $0x70] sm:$0xff] %v354
  %387 = vst [vmem:[%s2 + $0x78] sm:$0xff] %v355
  %388 = vst [vmem:[%s2 + $0x80] sm:$0xff] %v356
  %389 = vst [vmem:[%s2 + $0x88] sm:$0xff] %v357
  %390 = vst [vmem:[%s2 + $0x90] sm:$0xff] %v358
  %391 = vst [vmem:[%s2 + $0x98] sm:$0xff] %v359
  %392 = vst [vmem:[%s2 + $0xa0] sm:$0xff] %v360
  %393 = vst [vmem:[%s2 + $0xa8] sm:$0xff] %v361
  %394 = vst [vmem:[%s2 + $0xb0] sm:$0xff] %v362
  %395 = vst [vmem:[%s2 + $0xb8] sm:$0xff] %v363
  %396 = vst [vmem:[%s2 + $0xc0] sm:$0xff] %v364
  %397 = vst [vmem:[%s2 + $0xc8] sm:$0xff] %v365
  %398 = vst [vmem:[%s2 + $0xd0] sm:$0xff] %v366
  %399 = vst [vmem:[%s2 + $0xd8] sm:$0xff] %v367
  %400 = vst [vmem:[%s2 + $0xe0] sm:$0xff] %v368
  %401 = vst [vmem:[%s2 + $0xe8] sm:$0xff] %v369
  %402 = vst [vmem:[%s2 + $0xf0] sm:$0xff] %v370
  %403 = vst [vmem:[%s2 + $0xf8] sm:$0xff] %v371
  // Predicated region
  $region10: #{polynomial_cutoff_rbf.1} parent=0 // pred_check
    _
  $region11: #{polynomial_cutoff_rbf.1} parent=0 // pred_check_branch
    %405 = sbr.rel (0) target = $region13
  $region12: #{polynomial_cutoff_rbf.1} parent=0 // pred_region
    _
  $region13: #{polynomial_cutoff_rbf.1} parent=0 // pred_fallthru
    _
  // Predicated region
  $region14: #{polynomial_cutoff_rbf.1} parent=0 // pred_check
    _
  $region15: #{polynomial_cutoff_rbf.1} parent=0 // pred_check_branch
    %407 = sbr.rel (0) target = $region17
  $region16: #{polynomial_cutoff_rbf.1} parent=0 // pred_region
    _
  $region17: #{polynomial_cutoff_rbf.1} parent=0 // pred_fallthru
    _

</llo_original>
